<compile_context>
chip_gen: v6e
topology: v6e:2x2x1
jax: 0.10.0
libtpu: 0.0.40
codegen_flags: <defaults>
</compile_context>

<pallas_src>
import jax
import jax.numpy as jnp
from jax.experimental import pallas as pl
from jax.experimental.pallas import tpu as pltpu


# ----------------------------- Pallas kernel --------------------------------

def _fused_conv1x1_prelu_kernel(x1_ref, x2_ref, w1_ref, w2_ref, ba_ref, o_ref):
    # x1_ref: (1, C1, TT) native-modality tile          (original dtype)
    # x2_ref: (1, C2, TT) interpolated-other-modality   (bf16)
    # w1_ref: (Cout, C1)  w2_ref: (Cout, C2)            (bf16)
    # ba_ref: (Cout, 2)   column 0 = bias, column 1 = PReLU alpha (f32)
    # o_ref:  (1, Cout, TT)
    x1 = x1_ref[0].astype(jnp.bfloat16)       # cheap VPU cast, keeps MXU in bf16
    y = jnp.dot(w1_ref[...], x1, preferred_element_type=jnp.float32)
    y = y + jnp.dot(w2_ref[...], x2_ref[0], preferred_element_type=jnp.float32)
    bias = ba_ref[:, 0:1]                     # (Cout, 1) f32
    alpha = ba_ref[:, 1:2]                    # (Cout, 1) f32
    y = y + bias
    o_ref[0] = jnp.where(y >= 0.0, y, alpha * y).astype(o_ref.dtype)


# ------------------------------- wrapper -------------------------------------

def _round_up(x, m):
    return -(-x // m) * m


def _choose_time_tile(t, max_tile=2048):
    """Lane-dense T tile (multiple of 128), balanced to minimize padding."""
    t128 = _round_up(t, 128)
    if t128 <= max_tile:
        return t128                       # single tile covers all of T
    n_tiles = -(-t // max_tile)
    return _round_up(-(-t // n_tiles), 128)


def fused_conv1x1_prelu(x_native, x_interp, w_native, w_interp, bias_alpha,
                        *, out_dtype=jnp.bfloat16):
    """Pointwise conv over [x_native ; x_interp] channels + PReLU.

    x_native: [B, C1, T] (any float dtype), x_interp: [B, C2, T] (bf16)
    w_native: [Cout, C1], w_interp: [Cout, C2]
    bias_alpha: [Cout, 2] f32 (bias, alpha)
    returns [B, Cout, T] in out_dtype.
    """
    B, C1, T = x_native.shape
    _, C2, T2 = x_interp.shape
    assert T2 == T
    Cout = w_native.shape[0]

    TT = _choose_time_tile(T)
    T_pad = _round_up(T, TT)
    if T_pad != T:
        pad = ((0, 0), (0, 0), (0, T_pad - T))
        x_native = jnp.pad(x_native, pad)
        x_interp = jnp.pad(x_interp, pad)

    x1 = x_native                                   # original dtype; cast in-kernel
    x2 = x_interp.astype(jnp.bfloat16)
    w1 = w_native.astype(jnp.bfloat16)
    w2 = w_interp.astype(jnp.bfloat16)
    ba = bias_alpha.astype(jnp.float32)

    grid = (B, T_pad // TT)

    out_bytes = B * Cout * T_pad * jnp.dtype(out_dtype).itemsize
    cost = pl.CostEstimate(
        flops=int(2 * B * Cout * (C1 + C2) * T_pad),
        transcendentals=0,
        bytes_accessed=int(x1.size * jnp.dtype(x1.dtype).itemsize
                           + (x2.size + w1.size + w2.size) * 2
                           + ba.size * 4 + out_bytes),
    )

    out = pl.pallas_call(
        _fused_conv1x1_prelu_kernel,
        out_shape=jax.ShapeDtypeStruct((B, Cout, T_pad), out_dtype),
        grid_spec=pltpu.PrefetchScalarGridSpec(
            num_scalar_prefetch=0,
            grid=grid,
            in_specs=[
                pl.BlockSpec((1, C1, TT), lambda b, t: (b, 0, t)),
                pl.BlockSpec((1, C2, TT), lambda b, t: (b, 0, t)),
                pl.BlockSpec((Cout, C1), lambda b, t: (0, 0)),
                pl.BlockSpec((Cout, C2), lambda b, t: (0, 0)),
                pl.BlockSpec((Cout, 2), lambda b, t: (0, 0)),
            ],
            out_specs=pl.BlockSpec((1, Cout, TT), lambda b, t: (b, 0, t)),
        ),
        compiler_params=pltpu.CompilerParams(
            dimension_semantics=("parallel", "parallel"),
            # Blocks stay small (a few MiB double-buffered at 128 channels /
            # 2048 lanes); 32 MiB fits the v7x scoped-VMEM default with room.
            vmem_limit_bytes=32 * 1024 * 1024,
        ),
        cost_estimate=cost,
    )(x1, x2, w1, w2, ba)

    return out[..., :T] if T_pad != T else out


# ------------------------------- JAX glue ------------------------------------

def nearest_interp_1d(x, out_size):
    """F.interpolate(x, size=out_size, mode='nearest') for [B, C, T] input."""
    in_size = x.shape[-1]
    # PyTorch 'nearest': src = floor(dst * in_size / out_size)
    idx = (jnp.arange(out_size) * in_size) // out_size
    return x[..., idx]


def _pack_bias_alpha(bias, alpha, cout):
    b = jnp.asarray(bias, jnp.float32).reshape(cout)
    a = jnp.broadcast_to(jnp.asarray(alpha, jnp.float32).reshape(-1), (cout,))
    return jnp.stack([b, a], axis=1)            # (Cout, 2)


def thalamic_network(audio, video, params, *, out_dtype=jnp.bfloat16):
    """audio: [B, Ca, Ta], video: [B, Cv, Tv] -> ([B, Ca, Ta], [B, Cv, Tv])."""
    Ta = audio.shape[-1]
    Tv = video.shape[-1]
    Ca = audio.shape[1]

    # Interpolated intermediates are unavoidable HBM tensors (XLA gather) —
    # produce them directly in bf16 (gather is value-preserving, so casting
    # after the gather is numerically identical to casting before it).
    audio_interp = nearest_interp_1d(audio, Tv).astype(jnp.bfloat16)  # [B, Ca, Tv]
    video_interp = nearest_interp_1d(video, Ta).astype(jnp.bfloat16)  # [B, Cv, Ta]

    wa, wv = params["wa"], params["wv"]
    ba_a = _pack_bias_alpha(params["ba"], params["alpha_a"], wa.shape[0])
    ba_v = _pack_bias_alpha(params["bv"], params["alpha_v"], wv.shape[0])

    # audio_joint = cat([audio, video_interp]) -> wa[:, :Ca] @ audio + wa[:, Ca:] @ video_interp
    audio_result = fused_conv1x1_prelu(
        audio, video_interp, wa[:, :Ca], wa[:, Ca:], ba_a, out_dtype=out_dtype)
    # video_joint = cat([audio_interp, video]) -> wv[:, Ca:] @ video + wv[:, :Ca] @ audio_interp
    video_result = fused_conv1x1_prelu(
        video, audio_interp, wv[:, Ca:], wv[:, :Ca], ba_v, out_dtype=out_dtype)
    return audio_result, video_result


# --------------------------- pure-JAX reference -------------------------------

def thalamic_network_ref(audio, video, params, *, out_dtype=jnp.bfloat16):
    """Same bf16-input / f32-accumulate numerics as the kernel path."""
    Ta = audio.shape[-1]
    Tv = video.shape[-1]
    audio_bf = audio.astype(jnp.bfloat16)
    video_bf = video.astype(jnp.bfloat16)
    audio_interp = nearest_interp_1d(audio_bf, Tv)
    video_interp = nearest_interp_1d(video_bf, Ta)
    audio_joint = jnp.concatenate([audio_bf, video_interp], axis=1)
    video_joint = jnp.concatenate([audio_interp, video_bf], axis=1)

    def cb(x, w, b, al):
        y = jnp.einsum("oc,bct->bot", w.astype(jnp.bfloat16), x,
                       preferred_element_type=jnp.float32)
        y = y + jnp.asarray(b, jnp.float32)[None, :, None]
        a = jnp.asarray(al, jnp.float32).reshape(-1)[None, :, None]
        return jnp.where(y >= 0, y, a * y).astype(out_dtype)

    return (cb(audio_joint, params["wa"], params["ba"], params["alpha_a"]),
            cb(video_joint, params["wv"], params["bv"], params["alpha_v"]))


# ---------------------------------- main --------------------------------------

if __name__ == "__main__":
    # Small shapes consistent with the module (real defaults are 128/128 ch).
    B = 2
    Ca, Cv = 16, 16        # audio_channels, video_channels
    Ta, Tv = 128, 192      # audio / video temporal lengths (different rates)
    Cin = Ca + Cv

    key = jax.random.PRNGKey(0)
    k_a, k_v, k_wa, k_ba, k_wv, k_bv = jax.random.split(key, 6)

    audio = jax.random.normal(k_a, (B, Ca, Ta), dtype=jnp.float32)
    video = jax.random.normal(k_v, (B, Cv, Tv), dtype=jnp.float32)

    # Conv1d weight [Cout, Cin, 1] squeezed to [Cout, Cin]; PReLU default 0.25.
    scale = 1.0 / jnp.sqrt(jnp.float32(Cin))
    params = {
        "wa": jax.random.normal(k_wa, (Ca, Cin), dtype=jnp.float32) * scale,
        "ba": jax.random.normal(k_ba, (Ca,), dtype=jnp.float32) * scale,
        "alpha_a": jnp.float32(0.25),
        "wv": jax.random.normal(k_wv, (Cv, Cin), dtype=jnp.float32) * scale,
        "bv": jax.random.normal(k_bv, (Cv,), dtype=jnp.float32) * scale,
        "alpha_v": jnp.float32(0.25),
    }

    audio_out, video_out = thalamic_network(audio, video, params)
    jax.block_until_ready((audio_out, video_out))

    # Correctness check against a pure-JAX reference with matching bf16 numerics.
    audio_ref, video_ref = thalamic_network_ref(audio, video, params)
    assert audio_out.shape == (B, Ca, Ta)
    assert video_out.shape == (B, Cv, Tv)
    assert jnp.allclose(audio_out.astype(jnp.float32),
                        audio_ref.astype(jnp.float32), atol=2e-2, rtol=2e-2)
    assert jnp.allclose(video_out.astype(jnp.float32),
                        video_ref.astype(jnp.float32), atol=2e-2, rtol=2e-2)

    print("KERNEL_OK")
</pallas_src>

<mosaic_0001>
module attributes {stable_mosaic.version = 11 : i64} {
  func.func @_fused_conv1x1_prelu_kernel(%arg0: i32, %arg1: i32, %arg2: memref<1x16x128xf32, #tpu.memory_space<vmem>>, %arg3: memref<1x16x128xbf16, #tpu.memory_space<vmem>>, %arg4: memref<16x16xbf16, #tpu.memory_space<vmem>>, %arg5: memref<16x16xbf16, #tpu.memory_space<vmem>>, %arg6: memref<16x2xf32, #tpu.memory_space<vmem>>, %arg7: memref<1x16x128xbf16, #tpu.memory_space<vmem>>) attributes {dimension_semantics = [#tpu.dimension_semantics<parallel>, #tpu.dimension_semantics<parallel>], iteration_bounds = array<i64: 2, 1>, scalar_prefetch = 0 : i64, scratch_operands = 0 : i64, tpu.core_type = #tpu.core_type<tc>, window_params = [{transform_indices = @transform_0, window_bounds = array<i64: 1, 16, 128>}, {transform_indices = @transform_1, window_bounds = array<i64: 1, 16, 128>}, {pipeline_mode = #tpu.pipeline_mode<synchronous>, transform_indices = @transform_2, window_bounds = array<i64: 16, 16>}, {pipeline_mode = #tpu.pipeline_mode<synchronous>, transform_indices = @transform_3, window_bounds = array<i64: 16, 16>}, {pipeline_mode = #tpu.pipeline_mode<synchronous>, transform_indices = @transform_4, window_bounds = array<i64: 16, 2>}, {transform_indices = @transform_5, window_bounds = array<i64: 1, 16, 128>}]} {
    %c0 = arith.constant 0 : index
    %c0_0 = arith.constant 0 : index
    %c0_1 = arith.constant 0 : index
    %0 = vector.load %arg2[%c0, %c0_0, %c0_1] : memref<1x16x128xf32, #tpu.memory_space<vmem>>, vector<1x16x128xf32>
    %1 = vector.shape_cast %0 : vector<1x16x128xf32> to vector<16x128xf32>
    %2 = arith.truncf %1 : vector<16x128xf32> to vector<16x128xbf16>
    %c0_2 = arith.constant 0 : index
    %c0_3 = arith.constant 0 : index
    %3 = vector.load %arg4[%c0_2, %c0_3] : memref<16x16xbf16, #tpu.memory_space<vmem>>, vector<16x16xbf16>
    %cst = arith.constant dense<0.000000e+00> : vector<16x128xf32>
    %4 = tpu.matmul %3, %2, %cst {dimension_numbers = #tpu.dot_dimension_numbers<[1], [0], [0], [1], [0, 0, 1, 1], [], []>} : vector<16x16xbf16>, vector<16x128xbf16>, vector<16x128xf32> -> vector<16x128xf32>
    %c0_4 = arith.constant 0 : index
    %c0_5 = arith.constant 0 : index
    %5 = vector.load %arg5[%c0_4, %c0_5] : memref<16x16xbf16, #tpu.memory_space<vmem>>, vector<16x16xbf16>
    %c0_6 = arith.constant 0 : index
    %c0_7 = arith.constant 0 : index
    %c0_8 = arith.constant 0 : index
    %6 = vector.load %arg3[%c0_6, %c0_7, %c0_8] : memref<1x16x128xbf16, #tpu.memory_space<vmem>>, vector<1x16x128xbf16>
    %7 = vector.shape_cast %6 : vector<1x16x128xbf16> to vector<16x128xbf16>
    %cst_9 = arith.constant dense<0.000000e+00> : vector<16x128xf32>
    %8 = tpu.matmul %5, %7, %cst_9 {dimension_numbers = #tpu.dot_dimension_numbers<[1], [0], [0], [1], [0, 0, 1, 1], [], []>} : vector<16x16xbf16>, vector<16x128xbf16>, vector<16x128xf32> -> vector<16x128xf32>
    %9 = arith.addf %4, %8 : vector<16x128xf32>
    %c0_10 = arith.constant 0 : index
    %c0_11 = arith.constant 0 : index
    %10 = vector.load %arg6[%c0_10, %c0_11] : memref<16x2xf32, #tpu.memory_space<vmem>>, vector<16x1xf32>
    %c0_12 = arith.constant 0 : index
    %c1 = arith.constant 1 : index
    %11 = vector.load %arg6[%c0_12, %c1] : memref<16x2xf32, #tpu.memory_space<vmem>>, vector<16x1xf32>
    %12 = vector.broadcast %10 : vector<16x1xf32> to vector<16x128xf32>
    %13 = arith.addf %9, %12 : vector<16x128xf32>
    %cst_13 = arith.constant 0.000000e+00 : f32
    %14 = vector.broadcast %cst_13 : f32 to vector<16x128xf32>
    %15 = arith.cmpf oge, %13, %14 : vector<16x128xf32>
    %16 = vector.broadcast %11 : vector<16x1xf32> to vector<16x128xf32>
    %17 = arith.mulf %16, %13 : vector<16x128xf32>
    %18 = arith.select %15, %13, %17 : vector<16x128xi1>, vector<16x128xf32>
    %19 = arith.truncf %18 : vector<16x128xf32> to vector<16x128xbf16>
    %c0_14 = arith.constant 0 : index
    %c0_15 = arith.constant 0 : index
    %c0_16 = arith.constant 0 : index
    %20 = vector.load %arg7[%c0_14, %c0_15, %c0_16] : memref<1x16x128xbf16, #tpu.memory_space<vmem>>, vector<1x16x128xbf16>
    %21 = vector.shape_cast %20 : vector<1x16x128xbf16> to vector<16x128xbf16>
    %22 = vector.shape_cast %19 : vector<16x128xbf16> to vector<1x16x128xbf16>
    tpu.vector_store %arg7[%c0_14, %c0_15, %c0_16], %22 {strides = array<i32>} : memref<1x16x128xbf16, #tpu.memory_space<vmem>>, vector<1x16x128xbf16>,
    return
  }
  func.func @transform_0(%arg0: i32, %arg1: i32) -> (i32, i32, i32) {
    %c0_i32 = arith.constant 0 : i32
    %c0_i32_0 = arith.constant 0 : i32
    return %arg0, %c0_i32, %arg1 : i32, i32, i32
  }
  func.func @transform_1(%arg0: i32, %arg1: i32) -> (i32, i32, i32) {
    %c0_i32 = arith.constant 0 : i32
    %c0_i32_0 = arith.constant 0 : i32
    return %arg0, %c0_i32, %arg1 : i32, i32, i32
  }
  func.func @transform_2(%arg0: i32, %arg1: i32) -> (i32, i32) {
    %c0_i32 = arith.constant 0 : i32
    %c0_i32_0 = arith.constant 0 : i32
    %c0_i32_1 = arith.constant 0 : i32
    return %c0_i32, %c0_i32_0 : i32, i32
  }
  func.func @transform_3(%arg0: i32, %arg1: i32) -> (i32, i32) {
    %c0_i32 = arith.constant 0 : i32
    %c0_i32_0 = arith.constant 0 : i32
    %c0_i32_1 = arith.constant 0 : i32
    return %c0_i32, %c0_i32_0 : i32, i32
  }
  func.func @transform_4(%arg0: i32, %arg1: i32) -> (i32, i32) {
    %c0_i32 = arith.constant 0 : i32
    %c0_i32_0 = arith.constant 0 : i32
    %c0_i32_1 = arith.constant 0 : i32
    return %c0_i32, %c0_i32_0 : i32, i32
  }
  func.func @transform_5(%arg0: i32, %arg1: i32) -> (i32, i32, i32) {
    %c0_i32 = arith.constant 0 : i32
    %c0_i32_0 = arith.constant 0 : i32
    return %arg0, %c0_i32, %arg1 : i32, i32, i32
  }
}

</mosaic_0001>

<llo_original>
// kernel: tpu_custom_call.1
$region0: #{tpu_custom_call.1}
  #allocation0 [shape = 'u32[]', space=smem, size = 0x4, offset = 0x4, fixed_abs, tag = 'smem constant byte address 0x4 - core index']
  #allocation1 [shape = 'u32[144,128]{1,0:T(1,128)}', space=vmem, size = 0x12000, scoped, tag = 'internal scratch']
  %s0 = inlined_call_operand.hbm [shape: f32[2,16,128], index: 0, kind: input, shape index: {}]
  %s1 = inlined_call_operand.vmem [shape: bf16[2,16,128], index: 1, kind: input, shape index: {}]
  %s2 = inlined_call_operand.hbm [shape: bf16[16,16], index: 2, kind: input, shape index: {}]
  %s3 = inlined_call_operand.hbm [shape: bf16[16,16], index: 3, kind: input, shape index: {}]
  %s4 = inlined_call_operand.vmem [shape: f32[16,2], index: 4, kind: input, shape index: {}]
  %s5 = inlined_call_operand.hbm [shape: bf16[2,16,128], index: 5, kind: output, shape index: {}]
  %s6 = sld [smem:[#allocation0]]
  $region65: #{tpu_custom_call.1} parent=0
    _
  %s8 = ssub.s32 1, %s6
  %s9 = scalar_select 0, %s8, %s6
  $region1: #{tpu_custom_call.1} parent=0
    #allocation2 [shape = 'u8[16384]{0}', space=vmem, size = 0x4000, scoped, tag = 'input window, operand 0']
    #allocation3 [shape = 's32[2]{0}', space=sflag, size = 0x8, scoped, tag = 'scoped memory for tpu_custom_call.1']
    #allocation4 [shape = 's32[2]{0}', space=sflag, size = 0x8, scoped, tag = 'scoped memory for tpu_custom_call.1']
    #allocation5 [shape = 'u8[4096]{0}', space=vmem, size = 0x1000, scoped, tag = 'input window, operand 2, single buffered']
    #allocation6 [shape = 's32[1]{0}', space=sflag, size = 0x4, scoped, tag = 'scoped memory for tpu_custom_call.1']
    #allocation7 [shape = 'u8[4096]{0}', space=vmem, size = 0x1000, scoped, tag = 'input window, operand 3, single buffered']
    #allocation8 [shape = 'u8[8192]{0}', space=vmem, size = 0x2000, scoped, tag = 'output window, operand 0']
    %10 = vsyncpa [#allocation3], 0
    %s11 = scalar_lea.sflag [#allocation3], 1
    %12 = vsyncpa %s11, 0
    %13 = vsyncpa [#allocation6], 0
    %14 = vsyncpa [#allocation4], 0
    %s15 = scalar_lea.sflag [#allocation4], 1
    %16 = vsyncpa %s15, 0
    loop: start=0, step=1, limit=4
    $region2: #{tpu_custom_call.1} parent=1 // loop_pre_header
      _
    $region3: #{tpu_custom_call.1} parent=1 // loop_header
      %s18 = sphi 0, %s22
      %p19 = scmp.ge.s32.totalorder %s18, 4
      %s25 = sphi 0, %s37
      %s26 = sphi 0, %s33
      %s27 = sphi 0, %s25
      %s28 = sphi 0, %s26
      %s29 = sphi 0, %s27
      %s30 = sphi 0, %s28
      %s42 = sphi 0, %s44
      %s45 = sphi 0, %s42
      %s46 = sphi 0, %s45
      %s62 = sphi 0, %s46
      %s70 = sphi 0, %s72
      %s73 = sphi 0, %s70
      %s74 = sphi 0, %s73
      %s90 = sphi 0, %s74
      %s94 = sphi 0, %s94
      %s96 = sphi 0, %s94
      %s97 = sphi 0, %s96
      %s111 = sphi 0, %s97
      %s115 = sphi 0, %s115
      %s117 = sphi 0, %s115
      %s118 = sphi 0, %s117
      %s132 = sphi 0, %s118
      %s136 = sphi 0, %s136
      %s138 = sphi 0, %s136
      %s139 = sphi 0, %s138
      %s153 = sphi 0, %s139
      %s161 = sphi 0, %s163
      %s164 = sphi 0, %s161
      %s165 = sphi 0, %s164
      %s181 = sphi 0, %s165
    $region4: #{tpu_custom_call.1} parent=1 // loop_header_branch
      %21 = sbr.rel (%p19) target = $region8
    $region5: #{tpu_custom_call.1} parent=1 // loop_body
      %s23 = ssub.s32 %s18, 1
      %s24 = ssub.s32 %s18, 2
      %s31 = sadd.s32 1, %s26
      %p32 = scmp.ge.s32.totalorder %s31, 1
      %s33 = scalar_select %p32, 0, %s31
      %s34 = sadd.s32 1, %s25
      %s35 = scalar_select %p32, %s34, %s25
      %p36 = scmp.ge.s32.totalorder %s35, 2
      %s37 = scalar_select %p36, 0, %s35
      %s38 = ssub.s32 %s25, %s37
      %s39 = ssub.s32 %s26, %s33
      %s40 = sor.u32 %s38, %s39
      %p41 = scmp.eq.s32.totalorder %s40, 0
      %s43 = sadd.s32 %s42, 1
      %s44 = scalar_select %p41, %s42, %s43
      %p47 = pneg %p41
      %p48 = scmp.eq.s32.totalorder %s18, 1
      %p49 = por %p47, %p48
      %p50 = scmp.ne.s32.totalorder %s42, %s45
      %p51 = scmp.eq.s32.totalorder %s18, 0
      %p52 = por %p50, %p51
      %p53 = scmp.ne.s32.totalorder %s42, %s45
      %p54 = scmp.eq.s32.totalorder %s23, 1
      %p55 = por %p53, %p54
      %p56 = scmp.ne.s32.totalorder %s45, %s46
      %p57 = scmp.eq.s32.totalorder %s23, 0
      %p58 = por %p56, %p57
      %p59 = scmp.ne.s32.totalorder %s45, %s46
      %p60 = scmp.eq.s32.totalorder %s24, 1
      %p61 = por %p59, %p60
      %p63 = scmp.ne.s32.totalorder %s46, %s62
      %p64 = scmp.eq.s32.totalorder %s24, 0
      %p65 = por %p63, %p64
      %s66 = ssub.s32 %s25, %s37
      %s67 = ssub.s32 %s26, %s33
      %s68 = sor.u32 %s66, %s67
      %p69 = scmp.eq.s32.totalorder %s68, 0
      %s71 = sadd.s32 %s70, 1
      %s72 = scalar_select %p69, %s70, %s71
      %p75 = pneg %p69
      %p76 = scmp.eq.s32.totalorder %s18, 1
      %p77 = por %p75, %p76
      %p78 = scmp.ne.s32.totalorder %s70, %s73
      %p79 = scmp.eq.s32.totalorder %s18, 0
      %p80 = por %p78, %p79
      %p81 = scmp.ne.s32.totalorder %s70, %s73
      %p82 = scmp.eq.s32.totalorder %s23, 1
      %p83 = por %p81, %p82
      %p84 = scmp.ne.s32.totalorder %s73, %s74
      %p85 = scmp.eq.s32.totalorder %s23, 0
      %p86 = por %p84, %p85
      %p87 = scmp.ne.s32.totalorder %s73, %s74
      %p88 = scmp.eq.s32.totalorder %s24, 1
      %p89 = por %p87, %p88
      %p91 = scmp.ne.s32.totalorder %s74, %s90
      %p92 = scmp.eq.s32.totalorder %s24, 0
      %p93 = por %p91, %p92
      %s95 = sadd.s32 %s94, 1
      %p98 = scmp.eq.s32.totalorder %s18, 1
      %p99 = scmp.ne.s32.totalorder %s94, %s96
      %p100 = scmp.eq.s32.totalorder %s18, 0
      %p101 = por %p99, %p100
      %p102 = scmp.ne.s32.totalorder %s94, %s96
      %p103 = scmp.eq.s32.totalorder %s23, 1
      %p104 = por %p102, %p103
      %p105 = scmp.ne.s32.totalorder %s96, %s97
      %p106 = scmp.eq.s32.totalorder %s23, 0
      %p107 = por %p105, %p106
      %p108 = scmp.ne.s32.totalorder %s96, %s97
      %p109 = scmp.eq.s32.totalorder %s24, 1
      %p110 = por %p108, %p109
      %p112 = scmp.ne.s32.totalorder %s97, %s111
      %p113 = scmp.eq.s32.totalorder %s24, 0
      %p114 = por %p112, %p113
      %s116 = sadd.s32 %s115, 1
      %p119 = scmp.eq.s32.totalorder %s18, 1
      %p120 = scmp.ne.s32.totalorder %s115, %s117
      %p121 = scmp.eq.s32.totalorder %s18, 0
      %p122 = por %p120, %p121
      %p123 = scmp.ne.s32.totalorder %s115, %s117
      %p124 = scmp.eq.s32.totalorder %s23, 1
      %p125 = por %p123, %p124
      %p126 = scmp.ne.s32.totalorder %s117, %s118
      %p127 = scmp.eq.s32.totalorder %s23, 0
      %p128 = por %p126, %p127
      %p129 = scmp.ne.s32.totalorder %s117, %s118
      %p130 = scmp.eq.s32.totalorder %s24, 1
      %p131 = por %p129, %p130
      %p133 = scmp.ne.s32.totalorder %s118, %s132
      %p134 = scmp.eq.s32.totalorder %s24, 0
      %p135 = por %p133, %p134
      %s137 = sadd.s32 %s136, 1
      %p140 = scmp.eq.s32.totalorder %s18, 1
      %p141 = scmp.ne.s32.totalorder %s136, %s138
      %p142 = scmp.eq.s32.totalorder %s18, 0
      %p143 = por %p141, %p142
      %p144 = scmp.ne.s32.totalorder %s136, %s138
      %p145 = scmp.eq.s32.totalorder %s23, 1
      %p146 = por %p144, %p145
      %p147 = scmp.ne.s32.totalorder %s138, %s139
      %p148 = scmp.eq.s32.totalorder %s23, 0
      %p149 = por %p147, %p148
      %p150 = scmp.ne.s32.totalorder %s138, %s139
      %p151 = scmp.eq.s32.totalorder %s24, 1
      %p152 = por %p150, %p151
      %p154 = scmp.ne.s32.totalorder %s139, %s153
      %p155 = scmp.eq.s32.totalorder %s24, 0
      %p156 = por %p154, %p155
      %s157 = ssub.s32 %s25, %s37
      %s158 = ssub.s32 %s26, %s33
      %s159 = sor.u32 %s157, %s158
      %p160 = scmp.eq.s32.totalorder %s159, 0
      %s162 = sadd.s32 %s161, 1
      %s163 = scalar_select %p160, %s161, %s162
      %p166 = pneg %p160
      %p167 = scmp.eq.s32.totalorder %s18, 1
      %p168 = por %p166, %p167
      %p169 = scmp.ne.s32.totalorder %s161, %s164
      %p170 = scmp.eq.s32.totalorder %s18, 0
      %p171 = por %p169, %p170
      %p172 = scmp.ne.s32.totalorder %s161, %s164
      %p173 = scmp.eq.s32.totalorder %s23, 1
      %p174 = por %p172, %p173
      %p175 = scmp.ne.s32.totalorder %s164, %s165
      %p176 = scmp.eq.s32.totalorder %s23, 0
      %p177 = por %p175, %p176
      %p178 = scmp.ne.s32.totalorder %s164, %s165
      %p179 = scmp.eq.s32.totalorder %s24, 1
      %p180 = por %p178, %p179
      %p182 = scmp.ne.s32.totalorder %s165, %s181
      %p183 = scmp.eq.s32.totalorder %s24, 0
      %p184 = por %p182, %p183
      %p185 = scmp.le.s32.totalorder 1, %s18
      %p186 = scmp.lt.s32.totalorder %s18, 3
      %p187 = pnand %p185, %p186
      %p188 = pneg %p187
      // Predicated region
      $region9: #{tpu_custom_call.1} parent=5 // pred_check
        _
      $region10: #{tpu_custom_call.1} parent=5 // pred_check_branch
        %190 = sbr.rel (%p187) target = $region12
      $region11: #{tpu_custom_call.1} parent=5 // pred_region
        %s191 = ssub.s32 %s18, 1
        // Predicated region
        $region13: #{tpu_custom_call.1} parent=11 // pred_check
          %p192 = pneg %p107
        $region14: #{tpu_custom_call.1} parent=11 // pred_check_branch
          %194 = sbr.rel (%p192) target = $region16
        $region15: #{tpu_custom_call.1} parent=11 // pred_region
          %s196 = ssub.s32 128, 128
          %197 = vsyncadd [#allocation6], %s196
          %s198 = sshll.u32 [#allocation5], 4
          %s199 = int_to_ptr.vmem [resolvable:$true] %s198
          %204 = dma.hbm_to_vmem [thread:$0]  %s2, 128, %s199, [#allocation6], 64, 64, 4
        $region16: #{tpu_custom_call.1} parent=11 // pred_fallthru
          _
        // Predicated region
        $region17: #{tpu_custom_call.1} parent=11 // pred_check
          %p205 = pneg %p128
        $region18: #{tpu_custom_call.1} parent=11 // pred_check_branch
          %207 = sbr.rel (%p205) target = $region20
        $region19: #{tpu_custom_call.1} parent=11 // pred_region
          %s209 = ssub.s32 128, 128
          %210 = vsyncadd [#allocation6], %s209
          %s211 = sshll.u32 [#allocation7], 4
          %s212 = int_to_ptr.vmem [resolvable:$true] %s211
          %217 = dma.hbm_to_vmem [thread:$0]  %s3, 128, %s212, [#allocation6], 64, 64, 4
        $region20: #{tpu_custom_call.1} parent=11 // pred_fallthru
          _
        // Predicated region
        $region21: #{tpu_custom_call.1} parent=11 // pred_check
          %p218 = pneg %p149
        $region22: #{tpu_custom_call.1} parent=11 // pred_check_branch
          %220 = sbr.rel (%p218) target = $region24
        $region23: #{tpu_custom_call.1} parent=11 // pred_region
          _
        $region24: #{tpu_custom_call.1} parent=11 // pred_fallthru
          _
      $region12: #{tpu_custom_call.1} parent=5 // pred_fallthru
        _
      %p221 = scmp.lt.s32.totalorder %s18, 2
      // Predicated region
      $region25: #{tpu_custom_call.1} parent=5 // pred_check
        %p222 = pneg %p221
      $region26: #{tpu_custom_call.1} parent=5 // pred_check_branch
        %224 = sbr.rel (%p222) target = $region28
      $region27: #{tpu_custom_call.1} parent=5 // pred_region
        // Predicated region
        $region29: #{tpu_custom_call.1} parent=27 // pred_check
          %p225 = pneg %p52
        $region30: #{tpu_custom_call.1} parent=27 // pred_check_branch
          %227 = sbr.rel (%p225) target = $region32
        $region31: #{tpu_custom_call.1} parent=27 // pred_region
          %s228 = sand.u32 %s42, 1
          %s229 = scalar_lea.sflag [#allocation3], %s228
          %s230 = sand.u32 %s42, 1
          %s231 = smul.addr %s230, 16
          %s232 = scalar_lea.vmem [#allocation2], %s231
          %s234 = ssub.s32 256, 256
          %235 = vsyncadd %s229, %s234
          %s236 = smul.addr %s25, 2
          %s237 = sadd.s32 %s26, %s236
          %s238 = smul.addr %s237, 128
          %s239 = scalar_lea.hbm %s0, %s238
          %s240 = sshll.u32 %s232, 4
          %s241 = int_to_ptr.vmem [resolvable:$true] %s240
          %246 = dma.hbm_to_vmem [thread:$0]  %s239, 256, %s241, %s229, 128, 128, 8
        $region32: #{tpu_custom_call.1} parent=27 // pred_fallthru
          _
        // Predicated region
        $region33: #{tpu_custom_call.1} parent=27 // pred_check
          %p247 = pneg %p80
        $region34: #{tpu_custom_call.1} parent=27 // pred_check_branch
          %249 = sbr.rel (%p247) target = $region36
        $region35: #{tpu_custom_call.1} parent=27 // pred_region
          %p250 = scmp.lt.s32.totalorder %s25, 1
          %s251 = scalar_select %p250, %s25, 1
          %p252 = scmp.lt.s32.totalorder %s26, 0
          %s253 = scalar_select %p252, %s26, 0
          %s254 = smul.addr %s251, 2
          %s255 = sadd.s32 %s253, %s254
          %s256 = smul.addr %s255, 4
          %s257 = scalar_lea.vmem %s1, %s256
        $region36: #{tpu_custom_call.1} parent=27 // pred_fallthru
          _
      $region28: #{tpu_custom_call.1} parent=5 // pred_fallthru
        _
      %p258 = scmp.le.s32.totalorder 1, %s18
      %p259 = scmp.lt.s32.totalorder %s18, 3
      %p260 = pnand %p258, %p259
      %p261 = pneg %p260
      // Predicated region
      $region37: #{tpu_custom_call.1} parent=5 // pred_check
        _
      $region38: #{tpu_custom_call.1} parent=5 // pred_check_branch
        %263 = sbr.rel (%p260) target = $region40
      $region39: #{tpu_custom_call.1} parent=5 // pred_region
        %s264 = ssub.s32 %s18, 1
        %s265 = sand.u32 %s45, 1
        %s266 = scalar_lea.sflag [#allocation3], %s265
        %s267 = sand.u32 %s45, 1
        %s268 = smul.addr %s267, 16
        %s269 = scalar_lea.vmem [#allocation2], %s268
        // Predicated region
        $region41: #{tpu_custom_call.1} parent=39 // pred_check
          %p270 = pneg %p58
        $region42: #{tpu_custom_call.1} parent=39 // pred_check_branch
          %272 = sbr.rel (%p270) target = $region44
        $region43: #{tpu_custom_call.1} parent=39 // pred_region
          %273 = dma.done %s266, 256
        $region44: #{tpu_custom_call.1} parent=39 // pred_fallthru
          _
        // Predicated region
        $region45: #{tpu_custom_call.1} parent=39 // pred_check
          %p274 = pneg %p107
        $region46: #{tpu_custom_call.1} parent=39 // pred_check_branch
          %276 = sbr.rel (%p274) target = $region48
        $region47: #{tpu_custom_call.1} parent=39 // pred_region
          %277 = dma.done [#allocation6], 128
        $region48: #{tpu_custom_call.1} parent=39 // pred_fallthru
          _
        // Predicated region
        $region49: #{tpu_custom_call.1} parent=39 // pred_check
          %p278 = pneg %p128
        $region50: #{tpu_custom_call.1} parent=39 // pred_check_branch
          %280 = sbr.rel (%p278) target = $region52
        $region51: #{tpu_custom_call.1} parent=39 // pred_region
          %281 = dma.done [#allocation6], 128
        $region52: #{tpu_custom_call.1} parent=39 // pred_fallthru
          _
        %s282 = sand.u32 %s45, 1
        %s283 = scalar_lea.sflag [#allocation3], %s282
        %s284 = sand.u32 %s45, 1
        %s285 = smul.addr %s284, 16
        %s286 = scalar_lea.vmem [#allocation2], %s285
        %p287 = pneg %p58
        %p288 = pneg %p55
        %p289 = scmp.lt.s32.totalorder %s27, 1
        %s290 = scalar_select %p289, %s27, 1
        %p291 = scmp.lt.s32.totalorder %s28, 0
        %s292 = scalar_select %p291, %s28, 0
        %s293 = smul.addr %s290, 2
        %s294 = sadd.s32 %s292, %s293
        %s295 = smul.addr %s294, 4
        %s296 = scalar_lea.vmem %s1, %s295
        %p297 = pneg %p86
        %p298 = pneg %p83
        %p299 = pneg %p107
        %p300 = pneg %p104
        %p301 = pneg %p128
        %p302 = pneg %p125
        %p303 = pneg %p149
        %p304 = pneg %p146
        %p305 = pneg %p177
        %p306 = pneg %p174
        %s307 = sand.u32 %s164, 1
        %s308 = scalar_lea.sflag [#allocation4], %s307
        %s309 = sand.u32 %s164, 1
        %s310 = smul.addr %s309, 8
        %s311 = scalar_lea.vmem [#allocation8], %s310
        %p312 = scmp.lt.s32.totalorder %s27, 1
        %s313 = scalar_select %p312, %s27, 1
        %p314 = scmp.lt.s32.totalorder %s28, 0
        %s315 = scalar_select %p314, %s28, 0
        %s316 = smul.addr %s313, 2
        %s317 = sadd.s32 %s315, %s316
        %s318 = smul.addr %s317, 4
        %s319 = scalar_lea.vmem %s1, %s318
        %v321 = vld [vmem:[%s269] sm:$0xff]
        %v322 = vld [vmem:[%s269 + $0x8] sm:$0xff]
        %v323 = vpack.c.bf16 %v322, %v321
        %v324 = vld [vmem:[#allocation5] sm:$0xf]
        %v325 = vld [vmem:[#allocation5 + $0x4] sm:$0xf]
        %v326 = vld [vmem:[#allocation7] sm:$0xf]
        %v327 = vld [vmem:[#allocation7 + $0x4] sm:$0xf]
        %v328 = vld [vmem:[%s319] sm:$0xf]
        %v329 = vld [vmem:[%s319 + $0x4] sm:$0xf]
        %v332 = vunpack.c.l.b16 %v326
        %v333 = vunpack.c.l.b16 %v327
        %v334 = vpack.c.b16 %v333, %v332
        %v337 = vunpack.c.l.b16 %v328
        %v338 = vunpack.c.l.b16 %v329
        %v339 = vpack.c.b16 %v338, %v337
        %vm341 = vcmask 130048
        %v343 = vsel %vm341, %v334, 0
        %345 = vmatprep.subr.bf16.mxu0 0
        %346 = vmatpush1.bf16.msra.mxu0 0
        %347 = vmatprep.subr.bf16.mxu0 0
        %348 = vmatpush1.bf16.msra.mxu0 0
        %349 = vmatprep.subr.bf16.mxu0 0
        %350 = vmatpush1.bf16.msra.mxu0 0
        %351 = vmatprep.subr.bf16.mxu0 0
        %352 = vmatpush1.bf16.msra.mxu0 0
        %353 = vmatprep.subr.bf16.mxu0 0
        %354 = vmatpush1.bf16.msra.mxu0 0
        %355 = vmatprep.subr.bf16.mxu0 0
        %356 = vmatpush1.bf16.msra.mxu0 0
        %357 = vmatprep.subr.bf16.mxu0 0
        %358 = vmatpush1.bf16.msra.mxu0 0
        %359 = vmatprep.subr.bf16.mxu0 0
        %360 = vmatpush1.bf16.msra.mxu0 %v339
        %361 = vmatprep.subr.bf16.mxu0 0
        %362 = vmatpush2.bf16.msra.mxu0 0
        %363 = vmatprep.subr.bf16.mxu0 0
        %364 = vmatpush2.bf16.msra.mxu0 0
        %365 = vmatprep.subr.bf16.mxu0 0
        %366 = vmatpush2.bf16.msra.mxu0 0
        %367 = vmatprep.subr.bf16.mxu0 0
        %368 = vmatpush2.bf16.msra.mxu0 0
        %369 = vmatprep.subr.bf16.mxu0 0
        %370 = vmatpush2.bf16.msra.mxu0 0
        %371 = vmatprep.subr.bf16.mxu0 0
        %372 = vmatpush2.bf16.msra.mxu0 0
        %373 = vmatprep.subr.bf16.mxu0 0
        %374 = vmatpush2.bf16.msra.mxu0 0
        %375 = vmatprep.subr.bf16.mxu0 0
        %376 = vmatpush2.bf16.msra.mxu0 0
        %377 = vmatprep.mubr.bf16.mxu0 0
        %378 = vmatmul.mubr.bf16.gmra.mxu0 %v343
        %v379 = vpop.f32.mrf.mxu0
        %v380 = vadd.f32 0.0, %v379
        %v381 = vpop.f32.mrf.mxu0
        %v382 = vpop.f32.mrf.mxu0
        %v383 = vadd.f32 0.0, %v382
        %v384 = vpop.f32.mrf.mxu0
        %385 = vdwg.mxu0
        %v388 = vunpack.c.l.b16 %v324
        %v389 = vunpack.c.l.b16 %v325
        %v390 = vpack.c.b16 %v389, %v388
        %v392 = vsel %vm341, %v390, 0
        %394 = vmatprep.subr.bf16.mxu0 0
        %395 = vmatpush1.bf16.msra.mxu0 0
        %396 = vmatprep.subr.bf16.mxu0 0
        %397 = vmatpush1.bf16.msra.mxu0 0
        %398 = vmatprep.subr.bf16.mxu0 0
        %399 = vmatpush1.bf16.msra.mxu0 0
        %400 = vmatprep.subr.bf16.mxu0 0
        %401 = vmatpush1.bf16.msra.mxu0 0
        %402 = vmatprep.subr.bf16.mxu0 0
        %403 = vmatpush1.bf16.msra.mxu0 0
        %404 = vmatprep.subr.bf16.mxu0 0
        %405 = vmatpush1.bf16.msra.mxu0 0
        %406 = vmatprep.subr.bf16.mxu0 0
        %407 = vmatpush1.bf16.msra.mxu0 0
        %408 = vmatprep.subr.bf16.mxu0 0
        %409 = vmatpush1.bf16.msra.mxu0 %v323
        %410 = vmatprep.subr.bf16.mxu0 0
        %411 = vmatpush2.bf16.msra.mxu0 0
        %412 = vmatprep.subr.bf16.mxu0 0
        %413 = vmatpush2.bf16.msra.mxu0 0
        %414 = vmatprep.subr.bf16.mxu0 0
        %415 = vmatpush2.bf16.msra.mxu0 0
        %416 = vmatprep.subr.bf16.mxu0 0
        %417 = vmatpush2.bf16.msra.mxu0 0
        %418 = vmatprep.subr.bf16.mxu0 0
        %419 = vmatpush2.bf16.msra.mxu0 0
        %420 = vmatprep.subr.bf16.mxu0 0
        %421 = vmatpush2.bf16.msra.mxu0 0
        %422 = vmatprep.subr.bf16.mxu0 0
        %423 = vmatpush2.bf16.msra.mxu0 0
        %424 = vmatprep.subr.bf16.mxu0 0
        %425 = vmatpush2.bf16.msra.mxu0 0
        %426 = vmatprep.mubr.bf16.mxu0 0
        %427 = vmatmul.mubr.bf16.gmra.mxu0 %v392
        %v428 = vpop.f32.mrf.mxu0
        %v429 = vadd.f32 %v380, %v428
        %v430 = vpop.f32.mrf.mxu0
        %v431 = vpop.f32.mrf.mxu0
        %v432 = vadd.f32 %v383, %v431
        %v433 = vpop.f32.mrf.mxu0
        %434 = vdwg.mxu0
        %v435 = vld [vmem:[%s4] sm:$0xff]
        %v436 = vld [vmem:[%s4 + $0x8] sm:$0xff]
        %438 = vset.pattern.permute.xlu0 0
        %439 = vperm.xlu0 %438, %v435
        %v440 = vpop.permute.xlu0 %439
        %443 = vset.pattern.permute.xlu0 0
        %444 = vperm.xlu0 %443, %v436
        %v445 = vpop.permute.xlu0 %444
        %v447 = vadd.f32 %v429, %v440
        %v448 = vadd.f32 %v432, %v445
        %vm449 = vcmp.ge.f32.partialorder %v447, 0.0
        %vm450 = vcmp.ge.f32.partialorder %v448, 0.0
        %451 = vset.pattern.permute.xlu0 1
        %452 = vperm.xlu0 %451, %v435
        %v453 = vpop.permute.xlu0 %452
        %455 = vset.pattern.permute.xlu0 1
        %456 = vperm.xlu0 %455, %v436
        %v457 = vpop.permute.xlu0 %456
        %v459 = vmul.f32 %v453, %v447
        %v460 = vmul.f32 %v457, %v448
        %v461 = vsel %vm449, %v447, %v459
        %v462 = vsel %vm450, %v448, %v460
        %v463 = vpack.c.bf16 %v462, %v461
        %v465 = vunpack.c.l.b16 %v463
        %v466 = vunpack.c.h.b16 %v463
        %v467 = vpack.c.b16 %v465, %v465
        %v468 = vpack.c.b16 %v466, %v466
        %471 = vst [vmem:[%s311] sm:$0xf] %v467
        %472 = vst [vmem:[%s311 + $0x4] sm:$0xf] %v468
        %s473 = sand.u32 %s164, 1
        %s474 = scalar_lea.sflag [#allocation4], %s473
        %s475 = sand.u32 %s164, 1
        %s476 = smul.addr %s475, 8
        %s477 = scalar_lea.vmem [#allocation8], %s476
        // Predicated region
        $region53: #{tpu_custom_call.1} parent=39 // pred_check
          %p478 = pneg %p174
        $region54: #{tpu_custom_call.1} parent=39 // pred_check_branch
          %480 = sbr.rel (%p478) target = $region56
        $region55: #{tpu_custom_call.1} parent=39 // pred_region
          %s482 = ssub.s32 128, 128
          %483 = vsyncadd %s474, %s482
          %s484 = smul.addr %s27, 2
          %s485 = sadd.s32 %s28, %s484
          %s486 = smul.addr %s485, 64
          %s487 = scalar_lea.hbm %s5, %s486
          %s488 = sshll.u32 %s477, 4
          %s489 = int_to_ptr.vmem [resolvable:$true] %s488
          %494 = dma.vmem_to_hbm [thread:$0]  %s489, 128, %s487, %s474, 64, 64, 4
        $region56: #{tpu_custom_call.1} parent=39 // pred_fallthru
          _
      $region40: #{tpu_custom_call.1} parent=5 // pred_fallthru
        _
      %p495 = scmp.le.s32.totalorder 2, %s18
      // Predicated region
      $region57: #{tpu_custom_call.1} parent=5 // pred_check
        %p496 = pneg %p495
      $region58: #{tpu_custom_call.1} parent=5 // pred_check_branch
        %498 = sbr.rel (%p496) target = $region60
      $region59: #{tpu_custom_call.1} parent=5 // pred_region
        %s499 = ssub.s32 %s18, 2
        // Predicated region
        $region61: #{tpu_custom_call.1} parent=59 // pred_check
          %p500 = pneg %p180
        $region62: #{tpu_custom_call.1} parent=59 // pred_check_branch
          %502 = sbr.rel (%p500) target = $region64
        $region63: #{tpu_custom_call.1} parent=59 // pred_region
          %s503 = sand.u32 %s165, 1
          %s504 = scalar_lea.sflag [#allocation4], %s503
          %s505 = sand.u32 %s165, 1
          %s506 = smul.addr %s505, 8
          %s507 = scalar_lea.vmem [#allocation8], %s506
          %508 = dma.done %s504, 128
        $region64: #{tpu_custom_call.1} parent=59 // pred_fallthru
          _
      $region60: #{tpu_custom_call.1} parent=5 // pred_fallthru
        _
    $region6: #{tpu_custom_call.1} parent=1 // loop_footer
      %s22 = sadd.s32 1, %s18
    $region7: #{tpu_custom_call.1} parent=1 // loop_footer_branch
      %17 = sbr.rel target = $region3
    $region8: #{tpu_custom_call.1} parent=1 // loop_exit
      _
    %509 = vsyncpa [#allocation3], 1
    %s510 = scalar_lea.sflag [#allocation3], 1
    %511 = vsyncpa %s510, 1
    %512 = vsyncpa [#allocation6], 1
    %513 = vsyncpa [#allocation4], 1
    %s514 = scalar_lea.sflag [#allocation4], 1
    %515 = vsyncpa %s514, 1

</llo_original>
